<compile_context>
chip_gen: v7x
topology: tpu7x:2x2x1
jax: 0.10.0
libtpu: 0.0.40
codegen_flags: <defaults>
</compile_context>

<pallas_src>
import functools

import jax
import jax.numpy as jnp
from jax.experimental import pallas as pl
from jax.experimental.pallas import tpu as pltpu


FPAD = 128  # lane-dense padded feature width carried through the whole stack


# ---------------------------------------------------------------------------
# Generation-aware VMEM budget
# ---------------------------------------------------------------------------
def _default_vmem_limit():
    try:
        cap = pltpu.get_tpu_info().vmem_capacity_bytes
    except Exception:
        cap = 64 * 1024 * 1024  # v7x physical per-TC VMEM; safe floor
    # 75% of physical: 96 MiB on v5e/v6e (128 MiB), 48 MiB on v7x (64 MiB).
    return int(min(cap * 3 // 4, 112 * 1024 * 1024))


_VMEM_LIMIT = _default_vmem_limit()


# ---------------------------------------------------------------------------
# Fused Pallas kernel (whole L-layer stack in one call)
# ---------------------------------------------------------------------------
def make_fused_gcn_kernel(num_hidden):
    """Kernel ref order:
       x, adj_hbm, (w_i, shift_i) * num_hidden, w_last, b_last,
       out, adj_vmem_scratch, dma_sem
    """
    n_in = 4 + 2 * num_hidden  # x + adj + hidden pairs + (w_last, b_last)

    def kernel(*refs):
        x_ref, adj_hbm = refs[0], refs[1]
        out_ref = refs[n_in]
        adj_vmem = refs[n_in + 1]
        sem = refs[n_in + 2]

        # Kick off the adj HBM->VMEM DMA; it overlaps with the first feature
        # transform below, which does not need adj.
        adj_cp = pltpu.make_async_copy(adj_hbm, adj_vmem, sem)
        adj_cp.start()

        idx = 2

        # ---- first hidden layer: feature transform while DMA is in flight --
        w0 = refs[idx][...]            # [FPAD, FPAD] bf16, BN scale folded in
        shift0 = refs[idx + 1][...]    # [1, FPAD] f32 (bias + BN shift folded)
        idx += 2
        hw = jnp.dot(x_ref[...], w0, preferred_element_type=jnp.float32)

        adj_cp.wait()
        adj = adj_vmem[...]            # [N, N] bf16, resident for all layers

        agg = jnp.dot(adj, hw.astype(jnp.bfloat16),
                      preferred_element_type=jnp.float32)
        h = jnp.maximum(agg + shift0, 0.0)   # folded-BN epilogue + ReLU, f32
        # TODO(synk): dropout(training=True) not implemented (eval => identity)

        # ---- remaining hidden layers ---------------------------------------
        for _ in range(num_hidden - 1):
            w = refs[idx][...]
            shift = refs[idx + 1][...]
            idx += 2
            hw = jnp.dot(h.astype(jnp.bfloat16), w,
                         preferred_element_type=jnp.float32)
            agg = jnp.dot(adj, hw.astype(jnp.bfloat16),
                          preferred_element_type=jnp.float32)
            h = jnp.maximum(agg + shift, 0.0)

        # ---- final layer: GCNConv + bias + log_softmax ----------------------
        w_last = refs[idx][...]        # [FPAD, FPAD] bf16 (zero-padded cols)
        b_last = refs[idx + 1][...]    # [1, FPAD] f32, pad lanes baked = -1e30

        hw = jnp.dot(h.astype(jnp.bfloat16), w_last,
                     preferred_element_type=jnp.float32)
        logits = jnp.dot(adj, hw.astype(jnp.bfloat16),
                         preferred_element_type=jnp.float32) + b_last
        # Pad lanes of logits are exactly -1e30 (zero weight columns + baked
        # bias), so no in-kernel mask is needed before the softmax.

        m = jnp.max(logits, axis=-1, keepdims=True)
        z = logits - m
        lse = jnp.log(jnp.sum(jnp.exp(z), axis=-1, keepdims=True))
        out_ref[...] = z - lse         # lane-dense [N, FPAD] unmasked store

    return kernel


# ---------------------------------------------------------------------------
# One-time preparation (matches the module's cached=True semantics)
# ---------------------------------------------------------------------------
def _pad_to(a, shape):
    pads = [(0, s - d) for d, s in zip(a.shape, shape)]
    return jnp.pad(a, pads)


def prepare_gcn(params, adj):
    """Fold BN scale into hidden weights, pad everything to lane-dense slabs,
    cast matmul operands to bf16, bake the class mask into b_last.  Done once."""
    num_hidden = len(params) - 1
    out_channels = params[-1]["w"].shape[1]
    assert num_hidden >= 1
    for layer in params:
        assert layer["w"].shape[0] <= FPAD and layer["w"].shape[1] <= FPAD

    consts = [adj.astype(jnp.bfloat16)]
    for layer in params[:-1]:
        # (adj @ (h @ W)) * scale == adj @ (h @ (W * scale))  (per-column scale)
        w_folded = layer["w"] * layer["bn_scale"]
        consts.append(_pad_to(w_folded, (FPAD, FPAD)).astype(jnp.bfloat16))
        consts.append(_pad_to(layer["bn_shift_folded"], (1, FPAD)))
    last = params[-1]
    consts.append(_pad_to(last["w"], (FPAD, FPAD)).astype(jnp.bfloat16))
    # Bake the pad-lane mask into the final bias (f32, so -1e30 is finite).
    b_masked = jnp.full((1, FPAD), -1e30, jnp.float32)
    b_masked = b_masked.at[:, :out_channels].set(last["b"].astype(jnp.float32))
    consts.append(b_masked)

    return {
        "consts": tuple(jax.device_put(c) for c in consts),
        "num_hidden": num_hidden,
        "out_channels": out_channels,
    }


# ---------------------------------------------------------------------------
# Per-call wrapper (pad+cast x and the pallas_call live in one jit)
# ---------------------------------------------------------------------------
@functools.partial(jax.jit, static_argnames=("num_hidden", "out_channels"))
def _fused_call(x, consts, num_hidden, out_channels):
    n = x.shape[0]                       # static Python int inside jit
    x_pad = jnp.pad(x, ((0, 0), (0, FPAD - x.shape[1]))).astype(jnp.bfloat16)

    vmem = pl.BlockSpec(memory_space=pltpu.MemorySpace.VMEM)
    in_specs = [vmem,                                  # x
                pl.BlockSpec(memory_space=pl.ANY)]     # adj stays in HBM
    in_specs += [vmem] * (2 * num_hidden + 2)          # weights / shifts / bias

    out_pad = pl.pallas_call(
        make_fused_gcn_kernel(num_hidden),
        out_shape=jax.ShapeDtypeStruct((n, FPAD), jnp.float32),
        in_specs=in_specs,
        out_specs=vmem,
        scratch_shapes=[
            pltpu.VMEM((n, n), jnp.bfloat16),          # resident adjacency
            pltpu.SemaphoreType.DMA(()),
        ],
        compiler_params=pltpu.CompilerParams(
            vmem_limit_bytes=_VMEM_LIMIT,
        ),
    )(x_pad, *consts)
    return out_pad[:, :out_channels]


def gcn_forward(prepared, x):
    return _fused_call(x, prepared["consts"],
                       prepared["num_hidden"], prepared["out_channels"])


# ---------------------------------------------------------------------------
# Parameter construction + normalized adjacency (plain-JAX glue)
# ---------------------------------------------------------------------------
def glorot(key, fan_in, fan_out):
    lim = jnp.sqrt(6.0 / (fan_in + fan_out))
    return jax.random.uniform(key, (fan_in, fan_out), jnp.float32, -lim, lim)


def init_gcn_params(key, in_channels, hidden_channels, out_channels, num_layers):
    dims = [in_channels] + [hidden_channels] * (num_layers - 1) + [out_channels]
    params = []
    for i in range(num_layers):
        key, kw, kbias, kg, kb, km, kv = jax.random.split(key, 7)
        fin, fout = dims[i], dims[i + 1]
        w = glorot(kw, fin, fout)
        b = 0.1 * jax.random.normal(kbias, (1, fout), jnp.float32)
        layer = {"w": w, "b": b}
        if i < num_layers - 1:
            # BatchNorm1d eval-mode params + running stats, deterministic.
            gamma = 1.0 + 0.1 * jax.random.normal(kg, (fout,), jnp.float32)
            beta = 0.1 * jax.random.normal(kb, (fout,), jnp.float32)
            rmean = 0.05 * jax.random.normal(km, (fout,), jnp.float32)
            rvar = 1.0 + 0.1 * jax.random.uniform(kv, (fout,), jnp.float32)
            eps = 1e-5
            inv_std = 1.0 / jnp.sqrt(rvar + eps)
            scale = (gamma * inv_std).reshape(1, fout)
            shift = (beta - gamma * rmean * inv_std).reshape(1, fout)
            layer["bn_scale"] = scale
            # Fold the GCNConv bias into the BN shift:
            #   (agg + b)*scale + shift == agg*scale + (b*scale + shift)
            layer["bn_shift_folded"] = b * scale + shift
        params.append(layer)
    return params


def build_normalized_adj(key, n):
    """Dense symmetric adjacency with self-loops, D^-1/2 (A+I) D^-1/2."""
    a = (jax.random.uniform(key, (n, n)) < 0.1).astype(jnp.float32)
    a = jnp.maximum(a, a.T)
    a = a + jnp.eye(n, dtype=jnp.float32)
    a = jnp.minimum(a, 1.0)
    deg = jnp.sum(a, axis=1)
    d_inv_sqrt = 1.0 / jnp.sqrt(deg)
    return a * d_inv_sqrt[:, None] * d_inv_sqrt[None, :]


# ---------------------------------------------------------------------------
# Pure-JAX reference mirroring the prepared (bf16-folded) math
# ---------------------------------------------------------------------------
def gcn_reference(prepared, x):
    consts = prepared["consts"]
    num_hidden = prepared["num_hidden"]
    out_channels = prepared["out_channels"]
    adj = consts[0]
    h = jnp.pad(x, ((0, 0), (0, FPAD - x.shape[1]))).astype(jnp.bfloat16)
    idx = 1
    hw = jnp.dot(h, consts[idx], preferred_element_type=jnp.float32)
    agg = jnp.dot(adj, hw.astype(jnp.bfloat16), preferred_element_type=jnp.float32)
    h = jnp.maximum(agg + consts[idx + 1], 0.0)
    idx += 2
    for _ in range(num_hidden - 1):
        hw = jnp.dot(h.astype(jnp.bfloat16), consts[idx],
                     preferred_element_type=jnp.float32)
        agg = jnp.dot(adj, hw.astype(jnp.bfloat16),
                      preferred_element_type=jnp.float32)
        h = jnp.maximum(agg + consts[idx + 1], 0.0)
        idx += 2
    hw = jnp.dot(h.astype(jnp.bfloat16), consts[idx],
                 preferred_element_type=jnp.float32)
    logits = jnp.dot(adj, hw.astype(jnp.bfloat16),
                     preferred_element_type=jnp.float32) + consts[idx + 1]
    return jax.nn.log_softmax(logits[:, :out_channels], axis=-1)


if __name__ == "__main__":
    key = jax.random.PRNGKey(0)
    k_x, k_adj, k_p = jax.random.split(key, 3)

    # Small, module-consistent shapes: N nodes, feature dims per layer.
    num_nodes = 64
    in_channels, hidden_channels, out_channels = 16, 32, 8
    num_layers, dropout = 3, 0.5

    x = jax.random.normal(k_x, (num_nodes, in_channels), jnp.float32)
    adj = build_normalized_adj(k_adj, num_nodes)
    params = init_gcn_params(k_p, in_channels, hidden_channels, out_channels,
                             num_layers)

    # One-time constant preprocessing (mirrors GCNConv(cached=True)).
    prepared = prepare_gcn(params, adj)

    out = gcn_forward(prepared, x)
    out = jax.block_until_ready(out)

    # Sanity 1: shape and log_softmax rows sum to 1 in probability space.
    assert out.shape == (num_nodes, out_channels)
    row_prob_sum = jnp.exp(out).sum(axis=-1)
    assert bool(jnp.all(jnp.abs(row_prob_sum - 1.0) < 1e-3))

    # Sanity 2: matches a pure-JAX reference using identical bf16-folded math.
    ref = jax.block_until_ready(gcn_reference(prepared, x))
    assert bool(jnp.max(jnp.abs(out - ref)) < 5e-2)

    print("KERNEL_OK")
</pallas_src>

<mosaic_0001>
module attributes {stable_mosaic.version = 11 : i64} {
  func.func @kernel(%arg0: memref<64x128xbf16, #tpu.memory_space<vmem>>, %arg1: memref<64x64xbf16, #tpu.memory_space<any>>, %arg2: memref<128x128xbf16, #tpu.memory_space<vmem>>, %arg3: memref<1x128xf32, #tpu.memory_space<vmem>>, %arg4: memref<128x128xbf16, #tpu.memory_space<vmem>>, %arg5: memref<1x128xf32, #tpu.memory_space<vmem>>, %arg6: memref<128x128xbf16, #tpu.memory_space<vmem>>, %arg7: memref<1x128xf32, #tpu.memory_space<vmem>>, %arg8: memref<64x128xf32, #tpu.memory_space<vmem>>, %arg9: memref<64x64xbf16, #tpu.memory_space<vmem>>, %arg10: memref<!tpu.dma_semaphore, #tpu.memory_space<semaphore_mem>>) attributes {dimension_semantics = [], scalar_prefetch = 0 : i64, scratch_operands = 2 : i64, tpu.core_type = #tpu.core_type<tc>} {
    tpu.enqueue_dma source(%arg1 : memref<64x64xbf16, #tpu.memory_space<any>>) target(%arg9 : memref<64x64xbf16, #tpu.memory_space<vmem>>) target_semaphore(%arg10 : memref<!tpu.dma_semaphore, #tpu.memory_space<semaphore_mem>>)
    %c0 = arith.constant 0 : index
    %c0_0 = arith.constant 0 : index
    %0 = vector.load %arg2[%c0, %c0_0] : memref<128x128xbf16, #tpu.memory_space<vmem>>, vector<128x128xbf16>
    %c0_1 = arith.constant 0 : index
    %c0_2 = arith.constant 0 : index
    %1 = vector.load %arg3[%c0_1, %c0_2] : memref<1x128xf32, #tpu.memory_space<vmem>>, vector<1x128xf32>
    %c0_3 = arith.constant 0 : index
    %c0_4 = arith.constant 0 : index
    %2 = vector.load %arg0[%c0_3, %c0_4] : memref<64x128xbf16, #tpu.memory_space<vmem>>, vector<64x128xbf16>
    %cst = arith.constant dense<0.000000e+00> : vector<64x128xf32>
    %3 = tpu.matmul %2, %0, %cst {dimension_numbers = #tpu.dot_dimension_numbers<[1], [0], [0], [1], [0, 0, 1, 1], [], []>} : vector<64x128xbf16>, vector<128x128xbf16>, vector<64x128xf32> -> vector<64x128xf32>
    tpu.wait_dma2 semaphore(%arg10 : memref<!tpu.dma_semaphore, #tpu.memory_space<semaphore_mem>>) src(%arg1 : memref<64x64xbf16, #tpu.memory_space<any>>) dst(%arg9 : memref<64x64xbf16, #tpu.memory_space<vmem>>)
    %c0_5 = arith.constant 0 : index
    %c0_6 = arith.constant 0 : index
    %4 = vector.load %arg9[%c0_5, %c0_6] : memref<64x64xbf16, #tpu.memory_space<vmem>>, vector<64x64xbf16>
    %5 = arith.truncf %3 : vector<64x128xf32> to vector<64x128xbf16>
    %cst_7 = arith.constant dense<0.000000e+00> : vector<64x128xf32>
    %6 = tpu.matmul %4, %5, %cst_7 {dimension_numbers = #tpu.dot_dimension_numbers<[1], [0], [0], [1], [0, 0, 1, 1], [], []>} : vector<64x64xbf16>, vector<64x128xbf16>, vector<64x128xf32> -> vector<64x128xf32>
    %7 = vector.broadcast %1 : vector<1x128xf32> to vector<64x128xf32>
    %8 = arith.addf %6, %7 : vector<64x128xf32>
    %cst_8 = arith.constant 0.000000e+00 : f32
    %9 = vector.broadcast %cst_8 : f32 to vector<64x128xf32>
    %10 = arith.maximumf %8, %9 : vector<64x128xf32>
    %c0_9 = arith.constant 0 : index
    %c0_10 = arith.constant 0 : index
    %11 = vector.load %arg4[%c0_9, %c0_10] : memref<128x128xbf16, #tpu.memory_space<vmem>>, vector<128x128xbf16>
    %c0_11 = arith.constant 0 : index
    %c0_12 = arith.constant 0 : index
    %12 = vector.load %arg5[%c0_11, %c0_12] : memref<1x128xf32, #tpu.memory_space<vmem>>, vector<1x128xf32>
    %13 = arith.truncf %10 : vector<64x128xf32> to vector<64x128xbf16>
    %cst_13 = arith.constant dense<0.000000e+00> : vector<64x128xf32>
    %14 = tpu.matmul %13, %11, %cst_13 {dimension_numbers = #tpu.dot_dimension_numbers<[1], [0], [0], [1], [0, 0, 1, 1], [], []>} : vector<64x128xbf16>, vector<128x128xbf16>, vector<64x128xf32> -> vector<64x128xf32>
    %15 = arith.truncf %14 : vector<64x128xf32> to vector<64x128xbf16>
    %cst_14 = arith.constant dense<0.000000e+00> : vector<64x128xf32>
    %16 = tpu.matmul %4, %15, %cst_14 {dimension_numbers = #tpu.dot_dimension_numbers<[1], [0], [0], [1], [0, 0, 1, 1], [], []>} : vector<64x64xbf16>, vector<64x128xbf16>, vector<64x128xf32> -> vector<64x128xf32>
    %17 = vector.broadcast %12 : vector<1x128xf32> to vector<64x128xf32>
    %18 = arith.addf %16, %17 : vector<64x128xf32>
    %cst_15 = arith.constant 0.000000e+00 : f32
    %19 = vector.broadcast %cst_15 : f32 to vector<64x128xf32>
    %20 = arith.maximumf %18, %19 : vector<64x128xf32>
    %c0_16 = arith.constant 0 : index
    %c0_17 = arith.constant 0 : index
    %21 = vector.load %arg6[%c0_16, %c0_17] : memref<128x128xbf16, #tpu.memory_space<vmem>>, vector<128x128xbf16>
    %c0_18 = arith.constant 0 : index
    %c0_19 = arith.constant 0 : index
    %22 = vector.load %arg7[%c0_18, %c0_19] : memref<1x128xf32, #tpu.memory_space<vmem>>, vector<1x128xf32>
    %23 = arith.truncf %20 : vector<64x128xf32> to vector<64x128xbf16>
    %cst_20 = arith.constant dense<0.000000e+00> : vector<64x128xf32>
    %24 = tpu.matmul %23, %21, %cst_20 {dimension_numbers = #tpu.dot_dimension_numbers<[1], [0], [0], [1], [0, 0, 1, 1], [], []>} : vector<64x128xbf16>, vector<128x128xbf16>, vector<64x128xf32> -> vector<64x128xf32>
    %25 = arith.truncf %24 : vector<64x128xf32> to vector<64x128xbf16>
    %cst_21 = arith.constant dense<0.000000e+00> : vector<64x128xf32>
    %26 = tpu.matmul %4, %25, %cst_21 {dimension_numbers = #tpu.dot_dimension_numbers<[1], [0], [0], [1], [0, 0, 1, 1], [], []>} : vector<64x64xbf16>, vector<64x128xbf16>, vector<64x128xf32> -> vector<64x128xf32>
    %27 = vector.broadcast %22 : vector<1x128xf32> to vector<64x128xf32>
    %28 = arith.addf %26, %27 : vector<64x128xf32>
    %cst_22 = arith.constant dense<0xFF800000> : vector<64xf32>
    %29 = vector.multi_reduction <maximumf>, %28, %cst_22 [1] : vector<64x128xf32> to vector<64xf32>
    %30 = vector.shape_cast %29 : vector<64xf32> to vector<64x1xf32>
    %31 = vector.broadcast %30 : vector<64x1xf32> to vector<64x128xf32>
    %32 = arith.subf %28, %31 : vector<64x128xf32>
    %33 = math.exp %32 : vector<64x128xf32>
    %cst_23 = arith.constant dense<0.000000e+00> : vector<64xf32>
    %34 = vector.multi_reduction <add>, %33, %cst_23 [1] : vector<64x128xf32> to vector<64xf32>
    %35 = vector.shape_cast %34 : vector<64xf32> to vector<64x1xf32>
    %36 = math.log %35 : vector<64x1xf32>
    %37 = vector.broadcast %36 : vector<64x1xf32> to vector<64x128xf32>
    %38 = arith.subf %32, %37 : vector<64x128xf32>
    %c0_24 = arith.constant 0 : index
    %c0_25 = arith.constant 0 : index
    %39 = vector.load %arg8[%c0_24, %c0_25] : memref<64x128xf32, #tpu.memory_space<vmem>>, vector<64x128xf32>
    tpu.vector_store %arg8[%c0_24, %c0_25], %38 {strides = array<i32>} : memref<64x128xf32, #tpu.memory_space<vmem>>, vector<64x128xf32>,
    return
  }
}

</mosaic_0001>

<llo_original>
// kernel: _fused_call.1
$region0: #{_fused_call.1}
  #allocation0 [shape = 'u32[]', space=smem, size = 0x4, offset = 0x4, fixed_abs, tag = 'smem constant byte address 0x4 - core index']
  #allocation1 [shape = 'u32[144,128]{1,0:T(1,128)}', space=vmem, size = 0x12000, scoped, tag = 'internal scratch']
  #allocation2 [shape = 'bf16[64,64]{1,0:T(16,128)(2,1)}', space=vmem, size = 0x4000, scoped, tag = 'scratch operand']
  #allocation3 [shape = 's32[1]{0}', space=sflag, size = 0x4, scoped, tag = 'scratch operand']
  #allocation6 [shape = 's32[]', space=sflag, size = 0x4, offset = 0, fixed_abs, tag = 'sflag constant byte address 0x0 - dummy sync flag']
  #allocation7 [shape = 's32[]', space=sflag, size = 0x4, offset = 0, fixed_abs, tag = 'sflag constant byte address 0x0 - dummy sync flag']
  #allocation8 [shape = 'u32[]', space=smem, size = 0x4, offset = 0x44, fixed_abs, tag = 'smem constant byte address 0x44 - assertion arg 0']
  #allocation9 [shape = 'u32[]', space=smem, size = 0x4, offset = 0x48, fixed_abs, tag = 'smem constant byte address 0x48 - assertion arg 1']
  %s0 = inlined_call_operand.vmem [shape: bf16[64,128], index: 0, kind: input, shape index: {}]
  %s1 = inlined_call_operand.hbm [shape: bf16[64,64], index: 1, kind: input, shape index: {}]
  %s2 = inlined_call_operand.vmem [shape: bf16[128,128], index: 2, kind: input, shape index: {}]
  %s3 = inlined_call_operand.vmem [shape: f32[1,128], index: 3, kind: input, shape index: {}]
  %s4 = inlined_call_operand.vmem [shape: bf16[128,128], index: 4, kind: input, shape index: {}]
  %s5 = inlined_call_operand.vmem [shape: f32[1,128], index: 5, kind: input, shape index: {}]
  %s6 = inlined_call_operand.hbm [shape: bf16[128,128], index: 6, kind: input, shape index: {}]
  %s7 = inlined_call_operand.vmem [shape: f32[1,128], index: 7, kind: input, shape index: {}]
  %s8 = inlined_call_operand.vmem [shape: f32[64,128], index: 8, kind: output, shape index: {}]
  %s9 = sld [smem:[#allocation0]]
  $region46: #{_fused_call.1} parent=0
    _
  %s11 = ssub.s32 1, %s9
  %s12 = scalar_select 0, %s11, %s9
  $region1: #{_fused_call.1} parent=0
    #allocation4 [shape = 'u8[32768]{0}', space=vmem, size = 0x8000, scoped, tag = 'input window, operand 6, single buffered']
    #allocation5 [shape = 's32[1]{0}', space=sflag, size = 0x4, scoped, tag = 'scoped memory for _fused_call.1']
    %13 = vsyncpa [#allocation5], 0
    // Predicated region
    $region2: #{_fused_call.1} parent=1 // pred_check
      _
    $region3: #{_fused_call.1} parent=1 // pred_check_branch
      %15 = sbr.rel (0) target = $region5
    $region4: #{_fused_call.1} parent=1 // pred_region
      _
    $region5: #{_fused_call.1} parent=1 // pred_fallthru
      _
    // Predicated region
    $region6: #{_fused_call.1} parent=1 // pred_check
      _
    $region7: #{_fused_call.1} parent=1 // pred_check_branch
      %17 = sbr.rel (0) target = $region9
    $region8: #{_fused_call.1} parent=1 // pred_region
      _
    $region9: #{_fused_call.1} parent=1 // pred_fallthru
      _
    // Predicated region
    $region10: #{_fused_call.1} parent=1 // pred_check
      _
    $region11: #{_fused_call.1} parent=1 // pred_check_branch
      %19 = sbr.rel (0) target = $region13
    $region12: #{_fused_call.1} parent=1 // pred_region
      _
    $region13: #{_fused_call.1} parent=1 // pred_fallthru
      _
    // Predicated region
    $region14: #{_fused_call.1} parent=1 // pred_check
      _
    $region15: #{_fused_call.1} parent=1 // pred_check_branch
      %21 = sbr.rel (0) target = $region17
    $region16: #{_fused_call.1} parent=1 // pred_region
      _
    $region17: #{_fused_call.1} parent=1 // pred_fallthru
      _
    // Predicated region
    $region18: #{_fused_call.1} parent=1 // pred_check
      _
    $region19: #{_fused_call.1} parent=1 // pred_check_branch
      %23 = sbr.rel (0) target = $region21
    $region20: #{_fused_call.1} parent=1 // pred_region
      _
    $region21: #{_fused_call.1} parent=1 // pred_fallthru
      _
    // Predicated region
    $region22: #{_fused_call.1} parent=1 // pred_check
      _
    $region23: #{_fused_call.1} parent=1 // pred_check_branch
      %25 = sbr.rel (0) target = $region25
    $region24: #{_fused_call.1} parent=1 // pred_region
      %s27 = ssub.s32 1024, 1024
      %28 = vsyncadd [#allocation5], %s27
      %s29 = sshll.u32 [#allocation4], 4
      %s30 = int_to_ptr.vmem [resolvable:$true] %s29
      %35 = dma.hbm_to_vmem [thread:$0]  %s6, 1024, %s30, [#allocation5], 64, 64, 4
    $region25: #{_fused_call.1} parent=1 // pred_fallthru
      _
    // Predicated region
    $region26: #{_fused_call.1} parent=1 // pred_check
      _
    $region27: #{_fused_call.1} parent=1 // pred_check_branch
      %37 = sbr.rel (0) target = $region29
    $region28: #{_fused_call.1} parent=1 // pred_region
      _
    $region29: #{_fused_call.1} parent=1 // pred_fallthru
      _
    // Predicated region
    $region30: #{_fused_call.1} parent=1 // pred_check
      _
    $region31: #{_fused_call.1} parent=1 // pred_check_branch
      %39 = sbr.rel (0) target = $region33
    $region32: #{_fused_call.1} parent=1 // pred_region
      %40 = dma.done [#allocation5], 1024
    $region33: #{_fused_call.1} parent=1 // pred_fallthru
      _
    // Predicated region
    $region34: #{_fused_call.1} parent=1 // pred_check
      _
    $region35: #{_fused_call.1} parent=1 // pred_check_branch
      %43 = sbr.rel target = $region37
    $region36: #{_fused_call.1} parent=1 // pred_region
      %44 = sst [smem:[#allocation8]] [#allocation7]
      %45 = sst [smem:[#allocation9]] [#allocation6]
    $region37: #{_fused_call.1} parent=1 // pred_fallthru
      _
    %47 = shalt.err (0)
    %s49 = sshll.u32 [#allocation2], 4
    %s50 = int_to_ptr.vmem [resolvable:$true] %s49
    %52 = dma.hbm_to_vmem [thread:$0]  %s1, 512, %s50, [#allocation3]
    %v53 = vld [vmem:[%s2] sm:$0xf]
    %v54 = vld [vmem:[%s2 + $0x4] sm:$0xf]
    %v55 = vld [vmem:[%s2 + $0x8] sm:$0xf]
    %v56 = vld [vmem:[%s2 + $0xc] sm:$0xf]
    %v57 = vld [vmem:[%s2 + $0x10] sm:$0xf]
    %v58 = vld [vmem:[%s2 + $0x14] sm:$0xf]
    %v59 = vld [vmem:[%s2 + $0x18] sm:$0xf]
    %v60 = vld [vmem:[%s2 + $0x1c] sm:$0xf]
    %v61 = vld [vmem:[%s2 + $0x20] sm:$0xf]
    %v62 = vld [vmem:[%s2 + $0x24] sm:$0xf]
    %v63 = vld [vmem:[%s2 + $0x28] sm:$0xf]
    %v64 = vld [vmem:[%s2 + $0x2c] sm:$0xf]
    %v65 = vld [vmem:[%s2 + $0x30] sm:$0xf]
    %v66 = vld [vmem:[%s2 + $0x34] sm:$0xf]
    %v67 = vld [vmem:[%s2 + $0x38] sm:$0xf]
    %v68 = vld [vmem:[%s2 + $0x3c] sm:$0xf]
    %v69 = vld [vmem:[%s3] sm:$0x1]
    %v70 = vld [vmem:[%s0] sm:$0xf]
    %v71 = vld [vmem:[%s0 + $0x4] sm:$0xf]
    %v72 = vld [vmem:[%s0 + $0x8] sm:$0xf]
    %v73 = vld [vmem:[%s0 + $0xc] sm:$0xf]
    %v74 = vld [vmem:[%s0 + $0x10] sm:$0xf]
    %v75 = vld [vmem:[%s0 + $0x14] sm:$0xf]
    %v76 = vld [vmem:[%s0 + $0x18] sm:$0xf]
    %v77 = vld [vmem:[%s0 + $0x1c] sm:$0xf]
    %v86 = vunpack.c.l.b16 %v70
    %v87 = vunpack.c.l.b16 %v71
    %v88 = vunpack.c.l.b16 %v72
    %v89 = vunpack.c.l.b16 %v73
    %v90 = vunpack.c.l.b16 %v74
    %v91 = vunpack.c.l.b16 %v75
    %v92 = vunpack.c.l.b16 %v76
    %v93 = vunpack.c.l.b16 %v77
    %v94 = vpack.c.b16 %v87, %v86
    %v95 = vpack.c.b16 %v89, %v88
    %v96 = vpack.c.b16 %v91, %v90
    %v97 = vpack.c.b16 %v93, %v92
    %v118 = vunpack.c.l.b16 %v53
    %v119 = vunpack.c.l.b16 %v54
    %v120 = vunpack.c.l.b16 %v55
    %v121 = vunpack.c.l.b16 %v56
    %v122 = vunpack.c.l.b16 %v57
    %v123 = vunpack.c.l.b16 %v58
    %v124 = vunpack.c.l.b16 %v59
    %v125 = vunpack.c.l.b16 %v60
    %v126 = vunpack.c.l.b16 %v61
    %v127 = vunpack.c.l.b16 %v62
    %v128 = vunpack.c.l.b16 %v63
    %v129 = vunpack.c.l.b16 %v64
    %v130 = vunpack.c.l.b16 %v65
    %v131 = vunpack.c.l.b16 %v66
    %v132 = vunpack.c.l.b16 %v67
    %v133 = vunpack.c.l.b16 %v68
    %v134 = vpack.c.b16 %v119, %v118
    %v135 = vpack.c.b16 %v121, %v120
    %v136 = vpack.c.b16 %v123, %v122
    %v137 = vpack.c.b16 %v125, %v124
    %v138 = vpack.c.b16 %v127, %v126
    %v139 = vpack.c.b16 %v129, %v128
    %v140 = vpack.c.b16 %v131, %v130
    %v141 = vpack.c.b16 %v133, %v132
    %150 = vmatprep.subr.bf16.mxu0 0
    %151 = vmatpush1.bf16.msra.mxu0 %v134
    %152 = vmatprep.subr.bf16.mxu0 0
    %153 = vmatpush1.bf16.msra.mxu0 %v135
    %154 = vmatprep.subr.bf16.mxu0 0
    %155 = vmatpush1.bf16.msra.mxu0 %v136
    %156 = vmatprep.subr.bf16.mxu0 0
    %157 = vmatpush1.bf16.msra.mxu0 %v137
    %158 = vmatprep.subr.bf16.mxu0 0
    %159 = vmatpush1.bf16.msra.mxu0 %v138
    %160 = vmatprep.subr.bf16.mxu0 0
    %161 = vmatpush1.bf16.msra.mxu0 %v139
    %162 = vmatprep.subr.bf16.mxu0 0
    %163 = vmatpush1.bf16.msra.mxu0 %v140
    %164 = vmatprep.subr.bf16.mxu0 0
    %165 = vmatpush1.bf16.msra.mxu0 %v141
    %166 = vmatprep.subr.bf16.mxu0 0
    %167 = vmatpush1.bf16.msra.mxu0 0
    %168 = vmatprep.subr.bf16.mxu0 0
    %169 = vmatpush1.bf16.msra.mxu0 0
    %170 = vmatprep.subr.bf16.mxu0 0
    %171 = vmatpush1.bf16.msra.mxu0 0
    %172 = vmatprep.subr.bf16.mxu0 0
    %173 = vmatpush1.bf16.msra.mxu0 0
    %174 = vmatprep.subr.bf16.mxu0 0
    %175 = vmatpush1.bf16.msra.mxu0 0
    %176 = vmatprep.subr.bf16.mxu0 0
    %177 = vmatpush1.bf16.msra.mxu0 0
    %178 = vmatprep.subr.bf16.mxu0 0
    %179 = vmatpush1.bf16.msra.mxu0 0
    %180 = vmatprep.subr.bf16.mxu0 0
    %181 = vmatpush1.bf16.msra.mxu0 0
    %182 = vmatprep.mubr.bf16.mxu0 0
    %183 = vmatmul.mubr.bf16.gmra.mrb[0].mxu0 %v94
    %v184 = vpop.f32.mrb[0].mxu0
    %v185 = vadd.f32 0.0, %v184
    %v186 = vpop.f32.mrb[0].mxu0
    %v187 = vpop.f32.mrb[0].mxu0
    %v188 = vadd.f32 0.0, %v187
    %v189 = vpop.f32.mrb[0].mxu0
    %190 = vmatprep.mubr.bf16.mxu0 0
    %191 = vmatmul.mubr.bf16.gmra.mrb[0].mxu0 %v95
    %v192 = vpop.f32.mrb[0].mxu0
    %v193 = vadd.f32 0.0, %v192
    %v194 = vpop.f32.mrb[0].mxu0
    %v195 = vpop.f32.mrb[0].mxu0
    %v196 = vadd.f32 0.0, %v195
    %v197 = vpop.f32.mrb[0].mxu0
    %198 = vmatprep.mubr.bf16.mxu0 0
    %199 = vmatmul.mubr.bf16.gmra.mrb[0].mxu0 %v96
    %v200 = vpop.f32.mrb[0].mxu0
    %v201 = vadd.f32 0.0, %v200
    %v202 = vpop.f32.mrb[0].mxu0
    %v203 = vpop.f32.mrb[0].mxu0
    %v204 = vadd.f32 0.0, %v203
    %v205 = vpop.f32.mrb[0].mxu0
    %206 = vmatprep.mubr.bf16.mxu0 0
    %207 = vmatmul.mubr.bf16.gmra.mrb[0].mxu0 %v97
    %v208 = vpop.f32.mrb[0].mxu0
    %v209 = vadd.f32 0.0, %v208
    %v210 = vpop.f32.mrb[0].mxu0
    %v211 = vpop.f32.mrb[0].mxu0
    %v212 = vadd.f32 0.0, %v211
    %v213 = vpop.f32.mrb[0].mxu0
    %214 = vdwg.mxu0
    %s215 = smul.u32 4, 8
    %s216 = smul.u32 %s215, 1
    %s217 = sshll.u32 %s216, 4
    %218 = dma.done [#allocation3], %s217
    %v219 = vld [vmem:[#allocation2] sm:$0xff]
    %v220 = vld [vmem:[#allocation2 + $0x8] sm:$0xff]
    %v221 = vld [vmem:[#allocation2 + $0x10] sm:$0xff]
    %v222 = vld [vmem:[#allocation2 + $0x18] sm:$0xff]
    %v223 = vpack.c.bf16 %v188, %v185
    %v224 = vpack.c.bf16 %v196, %v193
    %v225 = vpack.c.bf16 %v204, %v201
    %v226 = vpack.c.bf16 %v212, %v209
    %v228 = vlaneseq
    %v229 = vshrl.u32 %v228, 7
    %v230 = vsub.s32 0, %v229
    %v231 = vrot.slane %v69, %v230
    %vm233 = vcmask 523264
    %v235 = vsel %vm233, %v219, 0
    %v238 = vsel %vm233, %v220, 0
    %v241 = vsel %vm233, %v221, 0
    %v244 = vsel %vm233, %v222, 0
    %246 = vmatprep.subr.bf16.mxu0 0
    %247 = vmatpush1.bf16.msra.mxu0 %v223
    %248 = vmatprep.subr.bf16.mxu0 0
    %249 = vmatpush1.bf16.msra.mxu0 %v224
    %250 = vmatprep.subr.bf16.mxu0 0
    %251 = vmatpush1.bf16.msra.mxu0 %v225
    %252 = vmatprep.subr.bf16.mxu0 0
    %253 = vmatpush1.bf16.msra.mxu0 %v226
    %254 = vmatprep.subr.bf16.mxu0 0
    %255 = vmatpush1.bf16.msra.mxu0 0
    %256 = vmatprep.subr.bf16.mxu0 0
    %257 = vmatpush1.bf16.msra.mxu0 0
    %258 = vmatprep.subr.bf16.mxu0 0
    %259 = vmatpush1.bf16.msra.mxu0 0
    %260 = vmatprep.subr.bf16.mxu0 0
    %261 = vmatpush1.bf16.msra.mxu0 0
    %262 = vmatprep.subr.bf16.mxu0 0
    %263 = vmatpush1.bf16.msra.mxu0 0
    %264 = vmatprep.subr.bf16.mxu0 0
    %265 = vmatpush1.bf16.msra.mxu0 0
    %266 = vmatprep.subr.bf16.mxu0 0
    %267 = vmatpush1.bf16.msra.mxu0 0
    %268 = vmatprep.subr.bf16.mxu0 0
    %269 = vmatpush1.bf16.msra.mxu0 0
    %270 = vmatprep.subr.bf16.mxu0 0
    %271 = vmatpush1.bf16.msra.mxu0 0
    %272 = vmatprep.subr.bf16.mxu0 0
    %273 = vmatpush1.bf16.msra.mxu0 0
    %274 = vmatprep.subr.bf16.mxu0 0
    %275 = vmatpush1.bf16.msra.mxu0 0
    %276 = vmatprep.subr.bf16.mxu0 0
    %277 = vmatpush1.bf16.msra.mxu0 0
    %278 = vmatprep.mubr.bf16.mxu0 0
    %279 = vmatmul.mubr.bf16.gmra.mrb[0].mxu0 %v235
    %v280 = vpop.f32.mrb[0].mxu0
    %v281 = vadd.f32 %v231, %v280
    %v282 = vpop.f32.mrb[0].mxu0
    %v283 = vpop.f32.mrb[0].mxu0
    %v284 = vadd.f32 %v231, %v283
    %v285 = vpop.f32.mrb[0].mxu0
    %286 = vmatprep.mubr.bf16.mxu0 0
    %287 = vmatmul.mubr.bf16.gmra.mrb[0].mxu0 %v238
    %v288 = vpop.f32.mrb[0].mxu0
    %v289 = vadd.f32 %v231, %v288
    %v290 = vpop.f32.mrb[0].mxu0
    %v291 = vpop.f32.mrb[0].mxu0
    %v292 = vadd.f32 %v231, %v291
    %v293 = vpop.f32.mrb[0].mxu0
    %294 = vmatprep.mubr.bf16.mxu0 0
    %295 = vmatmul.mubr.bf16.gmra.mrb[0].mxu0 %v241
    %v296 = vpop.f32.mrb[0].mxu0
    %v297 = vadd.f32 %v231, %v296
    %v298 = vpop.f32.mrb[0].mxu0
    %v299 = vpop.f32.mrb[0].mxu0
    %v300 = vadd.f32 %v231, %v299
    %v301 = vpop.f32.mrb[0].mxu0
    %302 = vmatprep.mubr.bf16.mxu0 0
    %303 = vmatmul.mubr.bf16.gmra.mrb[0].mxu0 %v244
    %v304 = vpop.f32.mrb[0].mxu0
    %v305 = vadd.f32 %v231, %v304
    %v306 = vpop.f32.mrb[0].mxu0
    %v307 = vpop.f32.mrb[0].mxu0
    %v308 = vadd.f32 %v231, %v307
    %v309 = vpop.f32.mrb[0].mxu0
    %310 = vdwg.mxu0
    %v311 = vmax.f32 %v281, 0.0
    %v312 = vmax.f32 %v284, 0.0
    %v313 = vmax.f32 %v289, 0.0
    %v314 = vmax.f32 %v292, 0.0
    %v315 = vmax.f32 %v297, 0.0
    %v316 = vmax.f32 %v300, 0.0
    %v317 = vmax.f32 %v305, 0.0
    %v318 = vmax.f32 %v308, 0.0
    %v319 = vld [vmem:[%s4] sm:$0xf]
    %v320 = vld [vmem:[%s4 + $0x4] sm:$0xf]
    %v321 = vld [vmem:[%s4 + $0x8] sm:$0xf]
    %v322 = vld [vmem:[%s4 + $0xc] sm:$0xf]
    %v323 = vld [vmem:[%s4 + $0x10] sm:$0xf]
    %v324 = vld [vmem:[%s4 + $0x14] sm:$0xf]
    %v325 = vld [vmem:[%s4 + $0x18] sm:$0xf]
    %v326 = vld [vmem:[%s4 + $0x1c] sm:$0xf]
    %v327 = vld [vmem:[%s4 + $0x20] sm:$0xf]
    %v328 = vld [vmem:[%s4 + $0x24] sm:$0xf]
    %v329 = vld [vmem:[%s4 + $0x28] sm:$0xf]
    %v330 = vld [vmem:[%s4 + $0x2c] sm:$0xf]
    %v331 = vld [vmem:[%s4 + $0x30] sm:$0xf]
    %v332 = vld [vmem:[%s4 + $0x34] sm:$0xf]
    %v333 = vld [vmem:[%s4 + $0x38] sm:$0xf]
    %v334 = vld [vmem:[%s4 + $0x3c] sm:$0xf]
    %v335 = vld [vmem:[%s5] sm:$0x1]
    %v336 = vpack.c.bf16 %v312, %v311
    %v337 = vpack.c.bf16 %v314, %v313
    %v338 = vpack.c.bf16 %v316, %v315
    %v339 = vpack.c.bf16 %v318, %v317
    %v356 = vunpack.c.l.b16 %v319
    %v357 = vunpack.c.l.b16 %v320
    %v358 = vunpack.c.l.b16 %v321
    %v359 = vunpack.c.l.b16 %v322
    %v360 = vunpack.c.l.b16 %v323
    %v361 = vunpack.c.l.b16 %v324
    %v362 = vunpack.c.l.b16 %v325
    %v363 = vunpack.c.l.b16 %v326
    %v364 = vunpack.c.l.b16 %v327
    %v365 = vunpack.c.l.b16 %v328
    %v366 = vunpack.c.l.b16 %v329
    %v367 = vunpack.c.l.b16 %v330
    %v368 = vunpack.c.l.b16 %v331
    %v369 = vunpack.c.l.b16 %v332
    %v370 = vunpack.c.l.b16 %v333
    %v371 = vunpack.c.l.b16 %v334
    %v372 = vpack.c.b16 %v357, %v356
    %v373 = vpack.c.b16 %v359, %v358
    %v374 = vpack.c.b16 %v361, %v360
    %v375 = vpack.c.b16 %v363, %v362
    %v376 = vpack.c.b16 %v365, %v364
    %v377 = vpack.c.b16 %v367, %v366
    %v378 = vpack.c.b16 %v369, %v368
    %v379 = vpack.c.b16 %v371, %v370
    %388 = vmatprep.subr.bf16.mxu0 0
    %389 = vmatpush1.bf16.msra.mxu0 %v372
    %390 = vmatprep.subr.bf16.mxu0 0
    %391 = vmatpush1.bf16.msra.mxu0 %v373
    %392 = vmatprep.subr.bf16.mxu0 0
    %393 = vmatpush1.bf16.msra.mxu0 %v374
    %394 = vmatprep.subr.bf16.mxu0 0
    %395 = vmatpush1.bf16.msra.mxu0 %v375
    %396 = vmatprep.subr.bf16.mxu0 0
    %397 = vmatpush1.bf16.msra.mxu0 %v376
    %398 = vmatprep.subr.bf16.mxu0 0
    %399 = vmatpush1.bf16.msra.mxu0 %v377
    %400 = vmatprep.subr.bf16.mxu0 0
    %401 = vmatpush1.bf16.msra.mxu0 %v378
    %402 = vmatprep.subr.bf16.mxu0 0
    %403 = vmatpush1.bf16.msra.mxu0 %v379
    %404 = vmatprep.subr.bf16.mxu0 0
    %405 = vmatpush1.bf16.msra.mxu0 0
    %406 = vmatprep.subr.bf16.mxu0 0
    %407 = vmatpush1.bf16.msra.mxu0 0
    %408 = vmatprep.subr.bf16.mxu0 0
    %409 = vmatpush1.bf16.msra.mxu0 0
    %410 = vmatprep.subr.bf16.mxu0 0
    %411 = vmatpush1.bf16.msra.mxu0 0
    %412 = vmatprep.subr.bf16.mxu0 0
    %413 = vmatpush1.bf16.msra.mxu0 0
    %414 = vmatprep.subr.bf16.mxu0 0
    %415 = vmatpush1.bf16.msra.mxu0 0
    %416 = vmatprep.subr.bf16.mxu0 0
    %417 = vmatpush1.bf16.msra.mxu0 0
    %418 = vmatprep.subr.bf16.mxu0 0
    %419 = vmatpush1.bf16.msra.mxu0 0
    %420 = vmatprep.mubr.bf16.mxu0 0
    %421 = vmatmul.mubr.bf16.gmra.mrb[0].mxu0 %v336
    %v422 = vpop.f32.mrb[0].mxu0
    %v423 = vadd.f32 0.0, %v422
    %v424 = vpop.f32.mrb[0].mxu0
    %v425 = vpop.f32.mrb[0].mxu0
    %v426 = vadd.f32 0.0, %v425
    %v427 = vpop.f32.mrb[0].mxu0
    %428 = vmatprep.mubr.bf16.mxu0 0
    %429 = vmatmul.mubr.bf16.gmra.mrb[0].mxu0 %v337
    %v430 = vpop.f32.mrb[0].mxu0
    %v431 = vadd.f32 0.0, %v430
    %v432 = vpop.f32.mrb[0].mxu0
    %v433 = vpop.f32.mrb[0].mxu0
    %v434 = vadd.f32 0.0, %v433
    %v435 = vpop.f32.mrb[0].mxu0
    %436 = vmatprep.mubr.bf16.mxu0 0
    %437 = vmatmul.mubr.bf16.gmra.mrb[0].mxu0 %v338
    %v438 = vpop.f32.mrb[0].mxu0
    %v439 = vadd.f32 0.0, %v438
    %v440 = vpop.f32.mrb[0].mxu0
    %v441 = vpop.f32.mrb[0].mxu0
    %v442 = vadd.f32 0.0, %v441
    %v443 = vpop.f32.mrb[0].mxu0
    %444 = vmatprep.mubr.bf16.mxu0 0
    %445 = vmatmul.mubr.bf16.gmra.mrb[0].mxu0 %v339
    %v446 = vpop.f32.mrb[0].mxu0
    %v447 = vadd.f32 0.0, %v446
    %v448 = vpop.f32.mrb[0].mxu0
    %v449 = vpop.f32.mrb[0].mxu0
    %v450 = vadd.f32 0.0, %v449
    %v451 = vpop.f32.mrb[0].mxu0
    %452 = vdwg.mxu0
    %v453 = vpack.c.bf16 %v426, %v423
    %v454 = vpack.c.bf16 %v434, %v431
    %v455 = vpack.c.bf16 %v442, %v439
    %v456 = vpack.c.bf16 %v450, %v447
    %v458 = vlaneseq
    %v459 = vshrl.u32 %v458, 7
    %v460 = vsub.s32 0, %v459
    %v461 = vrot.slane %v335, %v460
    %463 = vmatprep.subr.bf16.mxu0 0
    %464 = vmatpush1.bf16.msra.mxu0 %v453
    %465 = vmatprep.subr.bf16.mxu0 0
    %466 = vmatpush1.bf16.msra.mxu0 %v454
    %467 = vmatprep.subr.bf16.mxu0 0
    %468 = vmatpush1.bf16.msra.mxu0 %v455
    %469 = vmatprep.subr.bf16.mxu0 0
    %470 = vmatpush1.bf16.msra.mxu0 %v456
    %471 = vmatprep.subr.bf16.mxu0 0
    %472 = vmatpush1.bf16.msra.mxu0 0
    %473 = vmatprep.subr.bf16.mxu0 0
    %474 = vmatpush1.bf16.msra.mxu0 0
    %475 = vmatprep.subr.bf16.mxu0 0
    %476 = vmatpush1.bf16.msra.mxu0 0
    %477 = vmatprep.subr.bf16.mxu0 0
    %478 = vmatpush1.bf16.msra.mxu0 0
    %479 = vmatprep.subr.bf16.mxu0 0
    %480 = vmatpush1.bf16.msra.mxu0 0
    %481 = vmatprep.subr.bf16.mxu0 0
    %482 = vmatpush1.bf16.msra.mxu0 0
    %483 = vmatprep.subr.bf16.mxu0 0
    %484 = vmatpush1.bf16.msra.mxu0 0
    %485 = vmatprep.subr.bf16.mxu0 0
    %486 = vmatpush1.bf16.msra.mxu0 0
    %487 = vmatprep.subr.bf16.mxu0 0
    %488 = vmatpush1.bf16.msra.mxu0 0
    %489 = vmatprep.subr.bf16.mxu0 0
    %490 = vmatpush1.bf16.msra.mxu0 0
    %491 = vmatprep.subr.bf16.mxu0 0
    %492 = vmatpush1.bf16.msra.mxu0 0
    %493 = vmatprep.subr.bf16.mxu0 0
    %494 = vmatpush1.bf16.msra.mxu0 0
    %495 = vmatprep.mubr.bf16.mxu0 0
    %496 = vmatmul.mubr.bf16.gmra.mrb[0].mxu0 %v235
    %v497 = vpop.f32.mrb[0].mxu0
    %v498 = vadd.f32 %v461, %v497
    %v499 = vpop.f32.mrb[0].mxu0
    %v500 = vpop.f32.mrb[0].mxu0
    %v501 = vadd.f32 %v461, %v500
    %v502 = vpop.f32.mrb[0].mxu0
    %503 = vmatprep.mubr.bf16.mxu0 0
    %504 = vmatmul.mubr.bf16.gmra.mrb[0].mxu0 %v238
    %v505 = vpop.f32.mrb[0].mxu0
    %v506 = vadd.f32 %v461, %v505
    %v507 = vpop.f32.mrb[0].mxu0
    %v508 = vpop.f32.mrb[0].mxu0
    %v509 = vadd.f32 %v461, %v508
    %v510 = vpop.f32.mrb[0].mxu0
    %511 = vmatprep.mubr.bf16.mxu0 0
    %512 = vmatmul.mubr.bf16.gmra.mrb[0].mxu0 %v241
    %v513 = vpop.f32.mrb[0].mxu0
    %v514 = vadd.f32 %v461, %v513
    %v515 = vpop.f32.mrb[0].mxu0
    %v516 = vpop.f32.mrb[0].mxu0
    %v517 = vadd.f32 %v461, %v516
    %v518 = vpop.f32.mrb[0].mxu0
    %519 = vmatprep.mubr.bf16.mxu0 0
    %520 = vmatmul.mubr.bf16.gmra.mrb[0].mxu0 %v244
    %v521 = vpop.f32.mrb[0].mxu0
    %v522 = vadd.f32 %v461, %v521
    %v523 = vpop.f32.mrb[0].mxu0
    %v524 = vpop.f32.mrb[0].mxu0
    %v525 = vadd.f32 %v461, %v524
    %v526 = vpop.f32.mrb[0].mxu0
    %527 = vdwg.mxu0
    %v528 = vmax.f32 %v498, 0.0
    %v529 = vmax.f32 %v501, 0.0
    %v530 = vmax.f32 %v506, 0.0
    %v531 = vmax.f32 %v509, 0.0
    %v532 = vmax.f32 %v514, 0.0
    %v533 = vmax.f32 %v517, 0.0
    %v534 = vmax.f32 %v522, 0.0
    %v535 = vmax.f32 %v525, 0.0
    %v536 = vld [vmem:[#allocation4] sm:$0xf]
    %v537 = vld [vmem:[#allocation4 + $0x4] sm:$0xf]
    %v538 = vld [vmem:[#allocation4 + $0x8] sm:$0xf]
    %v539 = vld [vmem:[#allocation4 + $0xc] sm:$0xf]
    %v540 = vld [vmem:[#allocation4 + $0x10] sm:$0xf]
    %v541 = vld [vmem:[#allocation4 + $0x14] sm:$0xf]
    %v542 = vld [vmem:[#allocation4 + $0x18] sm:$0xf]
    %v543 = vld [vmem:[#allocation4 + $0x1c] sm:$0xf]
    %v544 = vld [vmem:[#allocation4 + $0x20] sm:$0xf]
    %v545 = vld [vmem:[#allocation4 + $0x24] sm:$0xf]
    %v546 = vld [vmem:[#allocation4 + $0x28] sm:$0xf]
    %v547 = vld [vmem:[#allocation4 + $0x2c] sm:$0xf]
    %v548 = vld [vmem:[#allocation4 + $0x30] sm:$0xf]
    %v549 = vld [vmem:[#allocation4 + $0x34] sm:$0xf]
    %v550 = vld [vmem:[#allocation4 + $0x38] sm:$0xf]
    %v551 = vld [vmem:[#allocation4 + $0x3c] sm:$0xf]
    %v552 = vld [vmem:[%s7] sm:$0x1]
    %v553 = vpack.c.bf16 %v529, %v528
    %v554 = vpack.c.bf16 %v531, %v530
    %v555 = vpack.c.bf16 %v533, %v532
    %v556 = vpack.c.bf16 %v535, %v534
    %v573 = vunpack.c.l.b16 %v536
    %v574 = vunpack.c.l.b16 %v537
    %v575 = vunpack.c.l.b16 %v538
    %v576 = vunpack.c.l.b16 %v539
    %v577 = vunpack.c.l.b16 %v540
    %v578 = vunpack.c.l.b16 %v541
    %v579 = vunpack.c.l.b16 %v542
    %v580 = vunpack.c.l.b16 %v543
    %v581 = vunpack.c.l.b16 %v544
    %v582 = vunpack.c.l.b16 %v545
    %v583 = vunpack.c.l.b16 %v546
    %v584 = vunpack.c.l.b16 %v547
    %v585 = vunpack.c.l.b16 %v548
    %v586 = vunpack.c.l.b16 %v549
    %v587 = vunpack.c.l.b16 %v550
    %v588 = vunpack.c.l.b16 %v551
    %v589 = vpack.c.b16 %v574, %v573
    %v590 = vpack.c.b16 %v576, %v575
    %v591 = vpack.c.b16 %v578, %v577
    %v592 = vpack.c.b16 %v580, %v579
    %v593 = vpack.c.b16 %v582, %v581
    %v594 = vpack.c.b16 %v584, %v583
    %v595 = vpack.c.b16 %v586, %v585
    %v596 = vpack.c.b16 %v588, %v587
    %605 = vmatprep.subr.bf16.mxu0 0
    %606 = vmatpush1.bf16.msra.mxu0 %v589
    %607 = vmatprep.subr.bf16.mxu0 0
    %608 = vmatpush1.bf16.msra.mxu0 %v590
    %609 = vmatprep.subr.bf16.mxu0 0
    %610 = vmatpush1.bf16.msra.mxu0 %v591
    %611 = vmatprep.subr.bf16.mxu0 0
    %612 = vmatpush1.bf16.msra.mxu0 %v592
    %613 = vmatprep.subr.bf16.mxu0 0
    %614 = vmatpush1.bf16.msra.mxu0 %v593
    %615 = vmatprep.subr.bf16.mxu0 0
    %616 = vmatpush1.bf16.msra.mxu0 %v594
    %617 = vmatprep.subr.bf16.mxu0 0
    %618 = vmatpush1.bf16.msra.mxu0 %v595
    %619 = vmatprep.subr.bf16.mxu0 0
    %620 = vmatpush1.bf16.msra.mxu0 %v596
    %621 = vmatprep.subr.bf16.mxu0 0
    %622 = vmatpush1.bf16.msra.mxu0 0
    %623 = vmatprep.subr.bf16.mxu0 0
    %624 = vmatpush1.bf16.msra.mxu0 0
    %625 = vmatprep.subr.bf16.mxu0 0
    %626 = vmatpush1.bf16.msra.mxu0 0
    %627 = vmatprep.subr.bf16.mxu0 0
    %628 = vmatpush1.bf16.msra.mxu0 0
    %629 = vmatprep.subr.bf16.mxu0 0
    %630 = vmatpush1.bf16.msra.mxu0 0
    %631 = vmatprep.subr.bf16.mxu0 0
    %632 = vmatpush1.bf16.msra.mxu0 0
    %633 = vmatprep.subr.bf16.mxu0 0
    %634 = vmatpush1.bf16.msra.mxu0 0
    %635 = vmatprep.subr.bf16.mxu0 0
    %636 = vmatpush1.bf16.msra.mxu0 0
    %637 = vmatprep.mubr.bf16.mxu0 0
    %638 = vmatmul.mubr.bf16.gmra.mrb[0].mxu0 %v553
    %v639 = vpop.f32.mrb[0].mxu0
    %v640 = vadd.f32 0.0, %v639
    %v641 = vpop.f32.mrb[0].mxu0
    %v642 = vpop.f32.mrb[0].mxu0
    %v643 = vadd.f32 0.0, %v642
    %v644 = vpop.f32.mrb[0].mxu0
    %645 = vmatprep.mubr.bf16.mxu0 0
    %646 = vmatmul.mubr.bf16.gmra.mrb[0].mxu0 %v554
    %v647 = vpop.f32.mrb[0].mxu0
    %v648 = vadd.f32 0.0, %v647
    %v649 = vpop.f32.mrb[0].mxu0
    %v650 = vpop.f32.mrb[0].mxu0
    %v651 = vadd.f32 0.0, %v650
    %v652 = vpop.f32.mrb[0].mxu0
    %653 = vmatprep.mubr.bf16.mxu0 0
    %654 = vmatmul.mubr.bf16.gmra.mrb[0].mxu0 %v555
    %v655 = vpop.f32.mrb[0].mxu0
    %v656 = vadd.f32 0.0, %v655
    %v657 = vpop.f32.mrb[0].mxu0
    %v658 = vpop.f32.mrb[0].mxu0
    %v659 = vadd.f32 0.0, %v658
    %v660 = vpop.f32.mrb[0].mxu0
    %661 = vmatprep.mubr.bf16.mxu0 0
    %662 = vmatmul.mubr.bf16.gmra.mrb[0].mxu0 %v556
    %v663 = vpop.f32.mrb[0].mxu0
    %v664 = vadd.f32 0.0, %v663
    %v665 = vpop.f32.mrb[0].mxu0
    %v666 = vpop.f32.mrb[0].mxu0
    %v667 = vadd.f32 0.0, %v666
    %v668 = vpop.f32.mrb[0].mxu0
    %669 = vdwg.mxu0
    %v670 = vpack.c.bf16 %v643, %v640
    %v671 = vpack.c.bf16 %v651, %v648
    %v672 = vpack.c.bf16 %v659, %v656
    %v673 = vpack.c.bf16 %v667, %v664
    %v675 = vlaneseq
    %v676 = vshrl.u32 %v675, 7
    %v677 = vsub.s32 0, %v676
    %v678 = vrot.slane %v552, %v677
    %680 = vmatprep.subr.bf16.mxu0 0
    %681 = vmatpush1.bf16.msra.mxu0 %v670
    %682 = vmatprep.subr.bf16.mxu0 0
    %683 = vmatpush1.bf16.msra.mxu0 %v671
    %684 = vmatprep.subr.bf16.mxu0 0
    %685 = vmatpush1.bf16.msra.mxu0 %v672
    %686 = vmatprep.subr.bf16.mxu0 0
    %687 = vmatpush1.bf16.msra.mxu0 %v673
    %688 = vmatprep.subr.bf16.mxu0 0
    %689 = vmatpush1.bf16.msra.mxu0 0
    %690 = vmatprep.subr.bf16.mxu0 0
    %691 = vmatpush1.bf16.msra.mxu0 0
    %692 = vmatprep.subr.bf16.mxu0 0
    %693 = vmatpush1.bf16.msra.mxu0 0
    %694 = vmatprep.subr.bf16.mxu0 0
    %695 = vmatpush1.bf16.msra.mxu0 0
    %696 = vmatprep.subr.bf16.mxu0 0
    %697 = vmatpush1.bf16.msra.mxu0 0
    %698 = vmatprep.subr.bf16.mxu0 0
    %699 = vmatpush1.bf16.msra.mxu0 0
    %700 = vmatprep.subr.bf16.mxu0 0
    %701 = vmatpush1.bf16.msra.mxu0 0
    %702 = vmatprep.subr.bf16.mxu0 0
    %703 = vmatpush1.bf16.msra.mxu0 0
    %704 = vmatprep.subr.bf16.mxu0 0
    %705 = vmatpush1.bf16.msra.mxu0 0
    %706 = vmatprep.subr.bf16.mxu0 0
    %707 = vmatpush1.bf16.msra.mxu0 0
    %708 = vmatprep.subr.bf16.mxu0 0
    %709 = vmatpush1.bf16.msra.mxu0 0
    %710 = vmatprep.subr.bf16.mxu0 0
    %711 = vmatpush1.bf16.msra.mxu0 0
    %712 = vmatprep.mubr.bf16.mxu0 0
    %713 = vmatmul.mubr.bf16.gmra.mrb[0].mxu0 %v235
    %v714 = vpop.f32.mrb[0].mxu0
    %v715 = vadd.f32 %v678, %v714
    %v716 = vpop.f32.mrb[0].mxu0
    %v717 = vpop.f32.mrb[0].mxu0
    %v718 = vadd.f32 %v678, %v717
    %v719 = vpop.f32.mrb[0].mxu0
    %720 = vmatprep.mubr.bf16.mxu0 0
    %721 = vmatmul.mubr.bf16.gmra.mrb[0].mxu0 %v238
    %v722 = vpop.f32.mrb[0].mxu0
    %v723 = vadd.f32 %v678, %v722
    %v724 = vpop.f32.mrb[0].mxu0
    %v725 = vpop.f32.mrb[0].mxu0
    %v726 = vadd.f32 %v678, %v725
    %v727 = vpop.f32.mrb[0].mxu0
    %728 = vmatprep.mubr.bf16.mxu0 0
    %729 = vmatmul.mubr.bf16.gmra.mrb[0].mxu0 %v241
    %v730 = vpop.f32.mrb[0].mxu0
    %v731 = vadd.f32 %v678, %v730
    %v732 = vpop.f32.mrb[0].mxu0
    %v733 = vpop.f32.mrb[0].mxu0
    %v734 = vadd.f32 %v678, %v733
    %v735 = vpop.f32.mrb[0].mxu0
    %736 = vmatprep.mubr.bf16.mxu0 0
    %737 = vmatmul.mubr.bf16.gmra.mrb[0].mxu0 %v244
    %v738 = vpop.f32.mrb[0].mxu0
    %v739 = vadd.f32 %v678, %v738
    %v740 = vpop.f32.mrb[0].mxu0
    %v741 = vpop.f32.mrb[0].mxu0
    %v742 = vadd.f32 %v678, %v741
    %v743 = vpop.f32.mrb[0].mxu0
    %744 = vdwg.mxu0
    %745 = vmax.xlane.f32.xlu0 %v715
    %v746 = vpop.xlane.xlu0 %745
    %747 = vmax.xlane.f32.xlu0 %v718
    %v748 = vpop.xlane.xlu0 %747
    %749 = vmax.xlane.f32.xlu0 %v723
    %v750 = vpop.xlane.xlu0 %749
    %751 = vmax.xlane.f32.xlu0 %v726
    %v752 = vpop.xlane.xlu0 %751
    %753 = vmax.xlane.f32.xlu0 %v731
    %v754 = vpop.xlane.xlu0 %753
    %755 = vmax.xlane.f32.xlu0 %v734
    %v756 = vpop.xlane.xlu0 %755
    %757 = vmax.xlane.f32.xlu0 %v739
    %v758 = vpop.xlane.xlu0 %757
    %759 = vmax.xlane.f32.xlu0 %v742
    %v760 = vpop.xlane.xlu0 %759
    %v761 = vsub.f32 %v715, %v746
    %v762 = vsub.f32 %v718, %v748
    %v763 = vsub.f32 %v723, %v750
    %v764 = vsub.f32 %v726, %v752
    %v765 = vsub.f32 %v731, %v754
    %v766 = vsub.f32 %v734, %v756
    %v767 = vsub.f32 %v739, %v758
    %v768 = vsub.f32 %v742, %v760
    %v769 = vmul.f32 %v761, 1.442695
    %v770 = vpow.pop %v769
    %v771 = vmul.f32 %v762, 1.442695
    %v772 = vpow.pop %v771
    %v773 = vmul.f32 %v763, 1.442695
    %v774 = vpow.pop %v773
    %v775 = vmul.f32 %v764, 1.442695
    %v776 = vpow.pop %v775
    %v777 = vmul.f32 %v765, 1.442695
    %v778 = vpow.pop %v777
    %v779 = vmul.f32 %v766, 1.442695
    %v780 = vpow.pop %v779
    %v781 = vmul.f32 %v767, 1.442695
    %v782 = vpow.pop %v781
    %v783 = vmul.f32 %v768, 1.442695
    %v784 = vpow.pop %v783
    %785 = vadd.xlane.f32.xlu0 %v770
    %v786 = vpop.xlane.xlu0 %785
    %787 = vadd.xlane.f32.xlu0 %v772
    %v788 = vpop.xlane.xlu0 %787
    %789 = vadd.xlane.f32.xlu0 %v774
    %v790 = vpop.xlane.xlu0 %789
    %791 = vadd.xlane.f32.xlu0 %v776
    %v792 = vpop.xlane.xlu0 %791
    %793 = vadd.xlane.f32.xlu0 %v778
    %v794 = vpop.xlane.xlu0 %793
    %795 = vadd.xlane.f32.xlu0 %v780
    %v796 = vpop.xlane.xlu0 %795
    %797 = vadd.xlane.f32.xlu0 %v782
    %v798 = vpop.xlane.xlu0 %797
    %799 = vadd.xlane.f32.xlu0 %v784
    %v800 = vpop.xlane.xlu0 %799
    %v801 = vlog2.pop %v786
    %v802 = vmul.f32 %v801, 0.6931472
    %v803 = vlog2.pop %v788
    %v804 = vmul.f32 %v803, 0.6931472
    %v805 = vlog2.pop %v790
    %v806 = vmul.f32 %v805, 0.6931472
    %v807 = vlog2.pop %v792
    %v808 = vmul.f32 %v807, 0.6931472
    %v809 = vlog2.pop %v794
    %v810 = vmul.f32 %v809, 0.6931472
    %v811 = vlog2.pop %v796
    %v812 = vmul.f32 %v811, 0.6931472
    %v813 = vlog2.pop %v798
    %v814 = vmul.f32 %v813, 0.6931472
    %v815 = vlog2.pop %v800
    %v816 = vmul.f32 %v815, 0.6931472
    %v817 = vsub.f32 %v761, %v802
    %v818 = vsub.f32 %v762, %v804
    %v819 = vsub.f32 %v763, %v806
    %v820 = vsub.f32 %v764, %v808
    %v821 = vsub.f32 %v765, %v810
    %v822 = vsub.f32 %v766, %v812
    %v823 = vsub.f32 %v767, %v814
    %v824 = vsub.f32 %v768, %v816
    %825 = vst [vmem:[%s8] sm:$0xff] %v817
    %826 = vst [vmem:[%s8 + $0x8] sm:$0xff] %v818
    %827 = vst [vmem:[%s8 + $0x10] sm:$0xff] %v819
    %828 = vst [vmem:[%s8 + $0x18] sm:$0xff] %v820
    %829 = vst [vmem:[%s8 + $0x20] sm:$0xff] %v821
    %830 = vst [vmem:[%s8 + $0x28] sm:$0xff] %v822
    %831 = vst [vmem:[%s8 + $0x30] sm:$0xff] %v823
    %832 = vst [vmem:[%s8 + $0x38] sm:$0xff] %v824
    // Predicated region
    $region38: #{_fused_call.1} parent=1 // pred_check
      _
    $region39: #{_fused_call.1} parent=1 // pred_check_branch
      %834 = sbr.rel (0) target = $region41
    $region40: #{_fused_call.1} parent=1 // pred_region
      _
    $region41: #{_fused_call.1} parent=1 // pred_fallthru
      _
    // Predicated region
    $region42: #{_fused_call.1} parent=1 // pred_check
      _
    $region43: #{_fused_call.1} parent=1 // pred_check_branch
      %836 = sbr.rel (0) target = $region45
    $region44: #{_fused_call.1} parent=1 // pred_region
      _
    $region45: #{_fused_call.1} parent=1 // pred_fallthru
      _
    %837 = vsyncpa [#allocation5], 1
  %838 = vsyncmov [#allocation3]
  %s839 = vpop.sfrf %838
  %p840 = scmp.eq.s32.totalorder %s839, 0
  %p841 = pneg %p840
  %843 = shalt.err (%p841)

</llo_original>
